<compile_context>
chip_gen: v7x
topology: tpu7x:2x2x1
jax: 0.10.0
libtpu: 0.0.40
codegen_flags: <defaults>
</compile_context>

<pallas_src>
import jax
import jax.numpy as jnp
from jax.experimental import pallas as pl
from jax.experimental.pallas import tpu as pltpu


def _round_up(n, m):
    return ((n + m - 1) // m) * m


def ffnn_kernel(x_ref, w1_ref, b1_ref, w2_ref, b2_ref, o_ref):
    # Layer 1: Linear + Tanh (MXU matmul, f32 accumulate; tanh on EUP, f32 elementwise).
    h = jnp.dot(x_ref[...], w1_ref[...], preferred_element_type=jnp.float32)
    h = jnp.tanh(h + b1_ref[...])
    # Layer 2: Linear (lane-dense padded H and C -> unmasked vst on the output).
    out = jnp.dot(h.astype(w2_ref.dtype), w2_ref[...],
                  preferred_element_type=jnp.float32)
    o_ref[...] = (out + b2_ref[...]).astype(o_ref.dtype)


def prepare_params(w1, b1, w2, b2):
    """One-time (init-time) weight prep: pad hidden dim and class dim to full 128-lane
    widths so everything inside the kernel is lane-dense. Call once; do NOT call per step."""
    D_in, H = w1.shape
    C = w2.shape[1]
    H_pad = _round_up(max(H, 128), 128)
    C_pad = _round_up(max(C, 128), 128)
    w1_p = jnp.zeros((D_in, H_pad), w1.dtype).at[:, :H].set(w1)
    b1_p = jnp.zeros((1, H_pad), b1.dtype).at[:, :H].set(jnp.reshape(b1, (1, H)))
    w2_p = jnp.zeros((H_pad, C_pad), w2.dtype).at[:H, :C].set(w2)
    b2_p = jnp.zeros((1, C_pad), b2.dtype).at[:, :C].set(jnp.reshape(b2, (1, C)))
    return w1_p, b1_p, w2_p, b2_p


def two_layer_ffnn(x, params, *, block_rows=256):
    """x: [B, D_in]; params from prepare_params(). Returns padded logits [B, C_pad]
    (real classes in columns [:C]; padded columns are exactly 0)."""
    w1_p, b1_p, w2_p, b2_p = params
    B, D_in = x.shape
    H_pad = w1_p.shape[1]
    C_pad = w2_p.shape[1]
    itemsize = jnp.dtype(x.dtype).itemsize

    def cost(rows):
        return pl.CostEstimate(
            flops=2 * rows * (D_in * H_pad + H_pad * C_pad),
            transcendentals=rows * H_pad,
            bytes_accessed=itemsize * (rows * D_in + w1_p.size + b1_p.size
                                       + w2_p.size + b2_p.size + rows * C_pad))

    if B <= block_rows:
        # Tiny-batch path: single invocation, no grid, whole-array VMEM residency,
        # no double-buffering / pipeline bookkeeping.
        return pl.pallas_call(
            ffnn_kernel,
            out_shape=jax.ShapeDtypeStruct((B, C_pad), x.dtype),
            in_specs=[pl.BlockSpec(memory_space=pltpu.MemorySpace.VMEM)] * 5,
            out_specs=pl.BlockSpec(memory_space=pltpu.MemorySpace.VMEM),
            cost_estimate=cost(B),
        )(x, w1_p, b1_p, w2_p, b2_p)

    # Batched path: row-blocked parallel grid. Keeps per-block VMEM footprint small
    # (safe under v5e's 16 MiB / v7x's 32 MiB scoped VMEM defaults) and lets v7x
    # shard row blocks across its 2 TensorCores.
    B_pad = _round_up(B, block_rows)
    if B_pad != B:
        x = jnp.pad(x, ((0, B_pad - B), (0, 0)))
    grid = (B_pad // block_rows,)
    out = pl.pallas_call(
        ffnn_kernel,
        out_shape=jax.ShapeDtypeStruct((B_pad, C_pad), x.dtype),
        grid=grid,
        in_specs=[
            pl.BlockSpec((block_rows, D_in), lambda i: (i, 0)),   # x rows
            pl.BlockSpec((D_in, H_pad), lambda i: (0, 0)),        # w1 (resident)
            pl.BlockSpec((1, H_pad), lambda i: (0, 0)),           # b1
            pl.BlockSpec((H_pad, C_pad), lambda i: (0, 0)),       # w2
            pl.BlockSpec((1, C_pad), lambda i: (0, 0)),           # b2
        ],
        out_specs=pl.BlockSpec((block_rows, C_pad), lambda i: (i, 0)),
        compiler_params=pltpu.CompilerParams(
            dimension_semantics=("parallel",)),
        cost_estimate=cost(B_pad),
    )(x, w1_p, b1_p, w2_p, b2_p)
    return out[:B] if B_pad != B else out


if __name__ == "__main__":
    # config: att_input_size=32, fc_hidden_dim=64, num_classes=3, dropout=0.1
    batch = 8
    input_dim = 32
    hidden_dim = 64
    num_classes = 3

    key = jax.random.PRNGKey(0)
    kx, k1, k2, k3, k4, kb = jax.random.split(key, 6)

    x = jax.random.normal(kx, (batch, input_dim), dtype=jnp.float32)

    # Deterministic param init mimicking nn.Linear's U(-1/sqrt(fan_in), 1/sqrt(fan_in)).
    # Stored as [in, out] (PyTorch weight is [out, in]; pre-transposed).
    bound1 = 1.0 / (input_dim ** 0.5)
    w1 = jax.random.uniform(k1, (input_dim, hidden_dim), jnp.float32, -bound1, bound1)
    b1 = jax.random.uniform(k2, (1, hidden_dim), jnp.float32, -bound1, bound1)
    bound2 = 1.0 / (hidden_dim ** 0.5)
    w2 = jax.random.uniform(k3, (hidden_dim, num_classes), jnp.float32, -bound2, bound2)
    b2 = jax.random.uniform(k4, (1, num_classes), jnp.float32, -bound2, bound2)

    # TODO(synk): nn.Dropout training-mode (Bernoulli mask + 1/(1-p) scaling) is not
    # reproduced; forward here matches eval-mode semantics (dropout = identity).
    # If needed, implement in-kernel via pltpu.prng_seed + pltpu.prng_random_bits.

    # One-time init-time weight padding (hoisted out of the per-call hot path).
    params = prepare_params(w1, b1, w2, b2)
    params = jax.block_until_ready(params)

    ref_fn = lambda xx: jnp.tanh(xx @ w1 + b1) @ w2 + b2

    # --- tiny-batch path (no grid, whole-VMEM residency) ---
    out_padded = two_layer_ffnn(x, params)
    out_padded = jax.block_until_ready(out_padded)
    out = out_padded[:, :num_classes]   # downstream may keep the padded slab instead
    assert out.shape == (batch, num_classes)
    assert jnp.allclose(out, ref_fn(x), atol=1e-5, rtol=1e-5), "small-batch mismatch"

    # --- batched path (row-blocked parallel grid; amortizes launch/DMA, 2 TCs on v7x) ---
    big_batch = 384   # deliberately not a multiple of block_rows: exercises row padding
    xb = jax.random.normal(kb, (big_batch, input_dim), dtype=jnp.float32)
    outb = jax.block_until_ready(two_layer_ffnn(xb, params, block_rows=256))
    outb = outb[:, :num_classes]
    assert outb.shape == (big_batch, num_classes)
    assert jnp.allclose(outb, ref_fn(xb), atol=1e-5, rtol=1e-5), "batched mismatch"

    print("KERNEL_OK")
</pallas_src>

<mosaic_0001>
module attributes {stable_mosaic.version = 11 : i64} {
  func.func @ffnn_kernel(%arg0: memref<8x32xf32, #tpu.memory_space<vmem>>, %arg1: memref<32x128xf32, #tpu.memory_space<vmem>>, %arg2: memref<1x128xf32, #tpu.memory_space<vmem>>, %arg3: memref<128x128xf32, #tpu.memory_space<vmem>>, %arg4: memref<1x128xf32, #tpu.memory_space<vmem>>, %arg5: memref<8x128xf32, #tpu.memory_space<vmem>>) attributes {dimension_semantics = [], scalar_prefetch = 0 : i64, scratch_operands = 0 : i64, tpu.core_type = #tpu.core_type<tc>} {
    %c0 = arith.constant 0 : index
    %c0_0 = arith.constant 0 : index
    %0 = vector.load %arg0[%c0, %c0_0] : memref<8x32xf32, #tpu.memory_space<vmem>>, vector<8x32xf32>
    %c0_1 = arith.constant 0 : index
    %c0_2 = arith.constant 0 : index
    %1 = vector.load %arg1[%c0_1, %c0_2] : memref<32x128xf32, #tpu.memory_space<vmem>>, vector<32x128xf32>
    %cst = arith.constant dense<0.000000e+00> : vector<8x128xf32>
    %2 = tpu.matmul %0, %1, %cst {dimension_numbers = #tpu.dot_dimension_numbers<[1], [0], [0], [1], [0, 0, 1, 1], [], []>} : vector<8x32xf32>, vector<32x128xf32>, vector<8x128xf32> -> vector<8x128xf32>
    %c0_3 = arith.constant 0 : index
    %c0_4 = arith.constant 0 : index
    %3 = vector.load %arg2[%c0_3, %c0_4] : memref<1x128xf32, #tpu.memory_space<vmem>>, vector<1x128xf32>
    %4 = vector.broadcast %3 : vector<1x128xf32> to vector<8x128xf32>
    %5 = arith.addf %2, %4 : vector<8x128xf32>
    %6 = math.tanh %5 : vector<8x128xf32>
    %c0_5 = arith.constant 0 : index
    %c0_6 = arith.constant 0 : index
    %7 = vector.load %arg3[%c0_5, %c0_6] : memref<128x128xf32, #tpu.memory_space<vmem>>, vector<128x128xf32>
    %cst_7 = arith.constant dense<0.000000e+00> : vector<8x128xf32>
    %8 = tpu.matmul %6, %7, %cst_7 {dimension_numbers = #tpu.dot_dimension_numbers<[1], [0], [0], [1], [0, 0, 1, 1], [], []>} : vector<8x128xf32>, vector<128x128xf32>, vector<8x128xf32> -> vector<8x128xf32>
    %c0_8 = arith.constant 0 : index
    %c0_9 = arith.constant 0 : index
    %9 = vector.load %arg4[%c0_8, %c0_9] : memref<1x128xf32, #tpu.memory_space<vmem>>, vector<1x128xf32>
    %10 = vector.broadcast %9 : vector<1x128xf32> to vector<8x128xf32>
    %11 = arith.addf %8, %10 : vector<8x128xf32>
    %c0_10 = arith.constant 0 : index
    %c0_11 = arith.constant 0 : index
    %12 = vector.load %arg5[%c0_10, %c0_11] : memref<8x128xf32, #tpu.memory_space<vmem>>, vector<8x128xf32>
    tpu.vector_store %arg5[%c0_10, %c0_11], %11 {strides = array<i32>} : memref<8x128xf32, #tpu.memory_space<vmem>>, vector<8x128xf32>,
    return
  }
}

</mosaic_0001>

<llo_original>
// kernel: tpu_custom_call.1
$region0: #{tpu_custom_call.1}
  #allocation0 [shape = 'u32[]', space=smem, size = 0x4, offset = 0x4, fixed_abs, tag = 'smem constant byte address 0x4 - core index']
  #allocation1 [shape = 'u32[144,128]{1,0:T(1,128)}', space=vmem, size = 0x12000, scoped, tag = 'internal scratch']
  %s0 = inlined_call_operand.hbm [shape: f32[8,32], index: 0, kind: input, shape index: {}]
  %s1 = inlined_call_operand.hbm [shape: f32[32,128], index: 1, kind: input, shape index: {}]
  %s2 = inlined_call_operand.vmem [shape: f32[1,128], index: 2, kind: input, shape index: {}]
  %s3 = inlined_call_operand.hbm [shape: f32[128,128], index: 3, kind: input, shape index: {}]
  %s4 = inlined_call_operand.vmem [shape: f32[1,128], index: 4, kind: input, shape index: {}]
  %s5 = inlined_call_operand.hbm [shape: f32[8,128], index: 5, kind: output, shape index: {}]
  %s6 = sld [smem:[#allocation0]]
  $region42: #{tpu_custom_call.1} parent=0
    _
  %s8 = ssub.s32 1, %s6
  %s9 = scalar_select 0, %s8, %s6
  $region1: #{tpu_custom_call.1} parent=0
    #allocation2 [shape = 'u8[4096]{0}', space=vmem, size = 0x1000, scoped, tag = 'input window, operand 0, single buffered']
    #allocation3 [shape = 's32[1]{0}', space=sflag, size = 0x4, scoped, tag = 'scoped memory for tpu_custom_call.1']
    #allocation4 [shape = 's32[1]{0}', space=sflag, size = 0x4, scoped, tag = 'scoped memory for tpu_custom_call.1']
    #allocation5 [shape = 'u8[16384]{0}', space=vmem, size = 0x4000, scoped, tag = 'input window, operand 1, single buffered']
    #allocation6 [shape = 's32[1]{0}', space=sflag, size = 0x4, scoped, tag = 'scoped memory for tpu_custom_call.1']
    #allocation7 [shape = 'u8[65536]{0}', space=vmem, size = 0x10000, scoped, tag = 'input window, operand 3, single buffered']
    #allocation8 [shape = 'u8[4096]{0}', space=vmem, size = 0x1000, scoped, tag = 'output window, operand 0, single buffered']
    %10 = vsyncpa [#allocation3], 0
    %11 = vsyncpa [#allocation6], 0
    %12 = vsyncpa [#allocation4], 0
    // Predicated region
    $region2: #{tpu_custom_call.1} parent=1 // pred_check
      _
    $region3: #{tpu_custom_call.1} parent=1 // pred_check_branch
      %14 = sbr.rel (0) target = $region5
    $region4: #{tpu_custom_call.1} parent=1 // pred_region
      %s16 = ssub.s32 128, 128
      %17 = vsyncadd [#allocation3], %s16
      %s19 = sshll.u32 [#allocation2], 4
      %s20 = int_to_ptr.vmem [resolvable:$true] %s19
      %22 = dma.hbm_to_vmem [thread:$0]  %s0, 128, %s20, [#allocation3]
    $region5: #{tpu_custom_call.1} parent=1 // pred_fallthru
      _
    // Predicated region
    $region6: #{tpu_custom_call.1} parent=1 // pred_check
      _
    $region7: #{tpu_custom_call.1} parent=1 // pred_check_branch
      %24 = sbr.rel (0) target = $region9
    $region8: #{tpu_custom_call.1} parent=1 // pred_region
      %s26 = ssub.s32 512, 512
      %27 = vsyncadd [#allocation6], %s26
      %s28 = sshll.u32 [#allocation5], 4
      %s29 = int_to_ptr.vmem [resolvable:$true] %s28
      %34 = dma.hbm_to_vmem [thread:$0]  %s1, 512, %s29, [#allocation6], 128, 128, 8
    $region9: #{tpu_custom_call.1} parent=1 // pred_fallthru
      _
    // Predicated region
    $region10: #{tpu_custom_call.1} parent=1 // pred_check
      _
    $region11: #{tpu_custom_call.1} parent=1 // pred_check_branch
      %36 = sbr.rel (0) target = $region13
    $region12: #{tpu_custom_call.1} parent=1 // pred_region
      _
    $region13: #{tpu_custom_call.1} parent=1 // pred_fallthru
      _
    // Predicated region
    $region14: #{tpu_custom_call.1} parent=1 // pred_check
      _
    $region15: #{tpu_custom_call.1} parent=1 // pred_check_branch
      %38 = sbr.rel (0) target = $region17
    $region16: #{tpu_custom_call.1} parent=1 // pred_region
      %s40 = ssub.s32 2048, 2048
      %41 = vsyncadd [#allocation6], %s40
      %s42 = sshll.u32 [#allocation7], 4
      %s43 = int_to_ptr.vmem [resolvable:$true] %s42
      %48 = dma.hbm_to_vmem [thread:$0]  %s3, 2048, %s43, [#allocation6], 128, 128, 8
    $region17: #{tpu_custom_call.1} parent=1 // pred_fallthru
      _
    // Predicated region
    $region18: #{tpu_custom_call.1} parent=1 // pred_check
      _
    $region19: #{tpu_custom_call.1} parent=1 // pred_check_branch
      %50 = sbr.rel (0) target = $region21
    $region20: #{tpu_custom_call.1} parent=1 // pred_region
      _
    $region21: #{tpu_custom_call.1} parent=1 // pred_fallthru
      _
    // Predicated region
    $region22: #{tpu_custom_call.1} parent=1 // pred_check
      _
    $region23: #{tpu_custom_call.1} parent=1 // pred_check_branch
      %52 = sbr.rel (0) target = $region25
    $region24: #{tpu_custom_call.1} parent=1 // pred_region
      %53 = dma.done [#allocation3], 128
    $region25: #{tpu_custom_call.1} parent=1 // pred_fallthru
      _
    // Predicated region
    $region26: #{tpu_custom_call.1} parent=1 // pred_check
      _
    $region27: #{tpu_custom_call.1} parent=1 // pred_check_branch
      %55 = sbr.rel (0) target = $region29
    $region28: #{tpu_custom_call.1} parent=1 // pred_region
      %56 = dma.done [#allocation6], 512
    $region29: #{tpu_custom_call.1} parent=1 // pred_fallthru
      _
    // Predicated region
    $region30: #{tpu_custom_call.1} parent=1 // pred_check
      _
    $region31: #{tpu_custom_call.1} parent=1 // pred_check_branch
      %58 = sbr.rel (0) target = $region33
    $region32: #{tpu_custom_call.1} parent=1 // pred_region
      %59 = dma.done [#allocation6], 2048
    $region33: #{tpu_custom_call.1} parent=1 // pred_fallthru
      _
    %v60 = vld [vmem:[#allocation2] sm:$0xff]
    %v61 = vld [vmem:[#allocation5] sm:$0xff]
    %v62 = vld [vmem:[#allocation5 + $0x8] sm:$0xff]
    %v63 = vld [vmem:[#allocation5 + $0x10] sm:$0xff]
    %v64 = vld [vmem:[#allocation5 + $0x18] sm:$0xff]
    %v65 = vld [vmem:[%s2] sm:$0x1]
    %v67 = vlaneseq
    %v68 = vshrl.u32 %v67, 7
    %v69 = vsub.s32 0, %v68
    %v70 = vrot.slane %v65, %v69
    %vm72 = vcmask 261120
    %v74 = vsel %vm72, %v60, 0
    %76 = vmatprep.subr.mxu0 0.0
    %77 = vmatpush1.msra.mxu0 %v61
    %78 = vmatprep.subr.mxu0 0.0
    %79 = vmatpush1.msra.mxu0 %v62
    %80 = vmatprep.subr.mxu0 0.0
    %81 = vmatpush1.msra.mxu0 %v63
    %82 = vmatprep.subr.mxu0 0.0
    %83 = vmatpush1.msra.mxu0 %v64
    %84 = vmatprep.subr.mxu0 0.0
    %85 = vmatpush1.msra.mxu0 0.0
    %86 = vmatprep.subr.mxu0 0.0
    %87 = vmatpush1.msra.mxu0 0.0
    %88 = vmatprep.subr.mxu0 0.0
    %89 = vmatpush1.msra.mxu0 0.0
    %90 = vmatprep.subr.mxu0 0.0
    %91 = vmatpush1.msra.mxu0 0.0
    %92 = vmatprep.subr.mxu0 0.0
    %93 = vmatpush1.msra.mxu0 0.0
    %94 = vmatprep.subr.mxu0 0.0
    %95 = vmatpush1.msra.mxu0 0.0
    %96 = vmatprep.subr.mxu0 0.0
    %97 = vmatpush1.msra.mxu0 0.0
    %98 = vmatprep.subr.mxu0 0.0
    %99 = vmatpush1.msra.mxu0 0.0
    %100 = vmatprep.subr.mxu0 0.0
    %101 = vmatpush1.msra.mxu0 0.0
    %102 = vmatprep.subr.mxu0 0.0
    %103 = vmatpush1.msra.mxu0 0.0
    %104 = vmatprep.subr.mxu0 0.0
    %105 = vmatpush1.msra.mxu0 0.0
    %106 = vmatprep.subr.mxu0 0.0
    %107 = vmatpush1.msra.mxu0 0.0
    %108 = vmatprep.subr.mxu0 0.0
    %109 = vmatpush1.msra.mxu0 0.0
    %110 = vmatprep.subr.mxu0 0.0
    %111 = vmatpush1.msra.mxu0 0.0
    %112 = vmatprep.subr.mxu0 0.0
    %113 = vmatpush1.msra.mxu0 0.0
    %114 = vmatprep.subr.mxu0 0.0
    %115 = vmatpush1.msra.mxu0 0.0
    %116 = vmatprep.subr.mxu0 0.0
    %117 = vmatpush1.msra.mxu0 0.0
    %118 = vmatprep.subr.mxu0 0.0
    %119 = vmatpush1.msra.mxu0 0.0
    %120 = vmatprep.subr.mxu0 0.0
    %121 = vmatpush1.msra.mxu0 0.0
    %122 = vmatprep.subr.mxu0 0.0
    %123 = vmatpush1.msra.mxu0 0.0
    %124 = vmatprep.subr.mxu0 0.0
    %125 = vmatpush1.msra.mxu0 0.0
    %126 = vmatprep.subr.mxu0 0.0
    %127 = vmatpush1.msra.mxu0 0.0
    %128 = vmatprep.subr.mxu0 0.0
    %129 = vmatpush1.msra.mxu0 0.0
    %130 = vmatprep.subr.mxu0 0.0
    %131 = vmatpush1.msra.mxu0 0.0
    %132 = vmatprep.subr.mxu0 0.0
    %133 = vmatpush1.msra.mxu0 0.0
    %134 = vmatprep.subr.mxu0 0.0
    %135 = vmatpush1.msra.mxu0 0.0
    %136 = vmatprep.subr.mxu0 0.0
    %137 = vmatpush1.msra.mxu0 0.0
    %138 = vmatprep.subr.mxu0 0.0
    %139 = vmatpush1.msra.mxu0 0.0
    %140 = vmatprep.mubr.f32.mxu0 0.0
    %141 = vmatmul.mubr.f32.gmra.mrb[0].mxu0 %v74
    %v142 = vpop.f32.mrb[0].mxu0
    %v143 = vadd.f32 %v70, %v142
    %v144 = vpop.f32.mrb[0].mxu0
    %145 = vdwg.mxu0
    %v146 = vtanh.pop %v143
    %v147 = vld [vmem:[#allocation7] sm:$0xff]
    %v148 = vld [vmem:[#allocation7 + $0x8] sm:$0xff]
    %v149 = vld [vmem:[#allocation7 + $0x10] sm:$0xff]
    %v150 = vld [vmem:[#allocation7 + $0x18] sm:$0xff]
    %v151 = vld [vmem:[#allocation7 + $0x20] sm:$0xff]
    %v152 = vld [vmem:[#allocation7 + $0x28] sm:$0xff]
    %v153 = vld [vmem:[#allocation7 + $0x30] sm:$0xff]
    %v154 = vld [vmem:[#allocation7 + $0x38] sm:$0xff]
    %v155 = vld [vmem:[#allocation7 + $0x40] sm:$0xff]
    %v156 = vld [vmem:[#allocation7 + $0x48] sm:$0xff]
    %v157 = vld [vmem:[#allocation7 + $0x50] sm:$0xff]
    %v158 = vld [vmem:[#allocation7 + $0x58] sm:$0xff]
    %v159 = vld [vmem:[#allocation7 + $0x60] sm:$0xff]
    %v160 = vld [vmem:[#allocation7 + $0x68] sm:$0xff]
    %v161 = vld [vmem:[#allocation7 + $0x70] sm:$0xff]
    %v162 = vld [vmem:[#allocation7 + $0x78] sm:$0xff]
    %v163 = vld [vmem:[%s4] sm:$0x1]
    %v165 = vlaneseq
    %v166 = vshrl.u32 %v165, 7
    %v167 = vsub.s32 0, %v166
    %v168 = vrot.slane %v163, %v167
    %170 = vmatprep.subr.mxu0 0.0
    %171 = vmatpush1.msra.mxu0 %v147
    %172 = vmatprep.subr.mxu0 0.0
    %173 = vmatpush1.msra.mxu0 %v148
    %174 = vmatprep.subr.mxu0 0.0
    %175 = vmatpush1.msra.mxu0 %v149
    %176 = vmatprep.subr.mxu0 0.0
    %177 = vmatpush1.msra.mxu0 %v150
    %178 = vmatprep.subr.mxu0 0.0
    %179 = vmatpush1.msra.mxu0 %v151
    %180 = vmatprep.subr.mxu0 0.0
    %181 = vmatpush1.msra.mxu0 %v152
    %182 = vmatprep.subr.mxu0 0.0
    %183 = vmatpush1.msra.mxu0 %v153
    %184 = vmatprep.subr.mxu0 0.0
    %185 = vmatpush1.msra.mxu0 %v154
    %186 = vmatprep.subr.mxu0 0.0
    %187 = vmatpush1.msra.mxu0 %v155
    %188 = vmatprep.subr.mxu0 0.0
    %189 = vmatpush1.msra.mxu0 %v156
    %190 = vmatprep.subr.mxu0 0.0
    %191 = vmatpush1.msra.mxu0 %v157
    %192 = vmatprep.subr.mxu0 0.0
    %193 = vmatpush1.msra.mxu0 %v158
    %194 = vmatprep.subr.mxu0 0.0
    %195 = vmatpush1.msra.mxu0 %v159
    %196 = vmatprep.subr.mxu0 0.0
    %197 = vmatpush1.msra.mxu0 %v160
    %198 = vmatprep.subr.mxu0 0.0
    %199 = vmatpush1.msra.mxu0 %v161
    %200 = vmatprep.subr.mxu0 0.0
    %201 = vmatpush1.msra.mxu0 %v162
    %202 = vmatprep.subr.mxu0 0.0
    %203 = vmatpush1.msra.mxu0 0.0
    %204 = vmatprep.subr.mxu0 0.0
    %205 = vmatpush1.msra.mxu0 0.0
    %206 = vmatprep.subr.mxu0 0.0
    %207 = vmatpush1.msra.mxu0 0.0
    %208 = vmatprep.subr.mxu0 0.0
    %209 = vmatpush1.msra.mxu0 0.0
    %210 = vmatprep.subr.mxu0 0.0
    %211 = vmatpush1.msra.mxu0 0.0
    %212 = vmatprep.subr.mxu0 0.0
    %213 = vmatpush1.msra.mxu0 0.0
    %214 = vmatprep.subr.mxu0 0.0
    %215 = vmatpush1.msra.mxu0 0.0
    %216 = vmatprep.subr.mxu0 0.0
    %217 = vmatpush1.msra.mxu0 0.0
    %218 = vmatprep.subr.mxu0 0.0
    %219 = vmatpush1.msra.mxu0 0.0
    %220 = vmatprep.subr.mxu0 0.0
    %221 = vmatpush1.msra.mxu0 0.0
    %222 = vmatprep.subr.mxu0 0.0
    %223 = vmatpush1.msra.mxu0 0.0
    %224 = vmatprep.subr.mxu0 0.0
    %225 = vmatpush1.msra.mxu0 0.0
    %226 = vmatprep.subr.mxu0 0.0
    %227 = vmatpush1.msra.mxu0 0.0
    %228 = vmatprep.subr.mxu0 0.0
    %229 = vmatpush1.msra.mxu0 0.0
    %230 = vmatprep.subr.mxu0 0.0
    %231 = vmatpush1.msra.mxu0 0.0
    %232 = vmatprep.subr.mxu0 0.0
    %233 = vmatpush1.msra.mxu0 0.0
    %234 = vmatprep.mubr.f32.mxu0 0.0
    %235 = vmatmul.mubr.f32.gmra.mrb[0].mxu0 %v146
    %v236 = vpop.f32.mrb[0].mxu0
    %v237 = vadd.f32 %v168, %v236
    %v238 = vpop.f32.mrb[0].mxu0
    %239 = vdwg.mxu0
    %240 = vst [vmem:[#allocation8] sm:$0xff] %v237
    // Predicated region
    $region34: #{tpu_custom_call.1} parent=1 // pred_check
      _
    $region35: #{tpu_custom_call.1} parent=1 // pred_check_branch
      %242 = sbr.rel (0) target = $region37
    $region36: #{tpu_custom_call.1} parent=1 // pred_region
      %s244 = ssub.s32 128, 128
      %245 = vsyncadd [#allocation4], %s244
      %s247 = sshll.u32 [#allocation8], 4
      %s248 = int_to_ptr.vmem [resolvable:$true] %s247
      %250 = dma.vmem_to_hbm [thread:$0]  %s248, 128, %s5, [#allocation4]
    $region37: #{tpu_custom_call.1} parent=1 // pred_fallthru
      _
    // Predicated region
    $region38: #{tpu_custom_call.1} parent=1 // pred_check
      _
    $region39: #{tpu_custom_call.1} parent=1 // pred_check_branch
      %252 = sbr.rel (0) target = $region41
    $region40: #{tpu_custom_call.1} parent=1 // pred_region
      %253 = dma.done [#allocation4], 128
    $region41: #{tpu_custom_call.1} parent=1 // pred_fallthru
      _
    %254 = vsyncpa [#allocation3], 1
    %255 = vsyncpa [#allocation6], 1
    %256 = vsyncpa [#allocation4], 1

</llo_original>
